<compile_context>
chip_gen: v5e
topology: v5e:2x2
jax: 0.10.0
libtpu: 0.0.40
codegen_flags: <defaults>
</compile_context>

<pallas_src>
import jax
import jax.numpy as jnp
from jax.experimental import pallas as pl
from jax.experimental.pallas import tpu as pltpu


def conv1d_valid_kernel(x_ref, w_ref, o_ref):
    # x_ref: (C_in_pad, L_pad)     batch*length on lanes; row C_in is all-ones (bias row)
    # w_ref: (K, C_out, C_in_pad)  per-tap weight tiles; w_ref[0, :, C_in] holds the bias
    # o_ref: (C_out, L_pad)        lane-dense output
    K = w_ref.shape[0]
    L_pad = x_ref.shape[-1]

    x = x_ref[...]
    # Tap 0 (identity shift); it also carries the bias via the ones row of x.
    acc = jnp.dot(w_ref[0], x, preferred_element_type=jnp.float32)
    # Remaining taps: output column l needs input column l + k, i.e. a left
    # rotation by k lanes (pure XLU vrot). Wrapped-around lanes only land in
    # columns the wrapper drops (l >= L_out within each batch element).
    for k in range(1, K):
        xk = pltpu.roll(x, shift=L_pad - k, axis=1)  # == jnp.roll(x, -k, axis=1)
        acc = acc + jnp.dot(w_ref[k], xk, preferred_element_type=jnp.float32)
    o_ref[...] = acc.astype(o_ref.dtype)


@jax.jit
def conv1d_padding_valid(x, weight, bias):
    """x: (N, C_in, L) f32, weight: (C_out, C_in, K) f32, bias: (C_out,) f32."""
    N, C_in, L = x.shape
    C_out, _, K = weight.shape
    L_out = L - K + 1
    NL = N * L

    C_in_pad = ((C_in + 1 + 7) // 8) * 8      # sublane tile, incl. the ones (bias) row
    L_pad = ((NL + 127) // 128) * 128         # lane-dense (NL = 1280 -> no padding)

    # (N, C_in, L) -> (C_in_pad, L_pad): batch*length on the lane axis; row C_in = ones.
    x2 = jnp.zeros((C_in_pad, L_pad), x.dtype)
    x2 = x2.at[:C_in, :NL].set(jnp.transpose(x, (1, 0, 2)).reshape(C_in, NL))
    x2 = x2.at[C_in, :].set(1.0)

    # Per-tap weight tiles: w2[k, co, ci] = weight[co, ci, k]; bias folded into tap 0.
    w2 = jnp.zeros((K, C_out, C_in_pad), weight.dtype)
    w2 = w2.at[:, :, :C_in].set(jnp.transpose(weight, (2, 0, 1)))
    w2 = w2.at[0, :, C_in].set(bias)

    out2 = pl.pallas_call(
        conv1d_valid_kernel,
        out_shape=jax.ShapeDtypeStruct((C_out, L_pad), x.dtype),
        cost_estimate=pl.CostEstimate(
            flops=2 * C_out * K * C_in_pad * L_pad,
            transcendentals=0,
            bytes_accessed=4 * (C_in_pad * L_pad + K * C_out * C_in_pad + C_out * L_pad),
        ),
    )(x2, w2)

    # (C_out, L_pad) -> (N, C_out, L_out): drop pad lanes and per-batch tap-spill tail.
    out = out2[:, :NL].reshape(C_out, N, L)
    return jnp.transpose(out, (1, 0, 2))[:, :, :L_out]


if __name__ == "__main__":
    key = jax.random.PRNGKey(0)
    k_x, k_w, k_b = jax.random.split(key, 3)

    # Shapes match the module's get_example_inputs(): (10, 3, 128).
    N, C_IN, C_OUT, KSZ, L = 10, 3, 3, 3, 128

    x = jax.random.normal(k_x, (N, C_IN, L), dtype=jnp.float32)
    # PyTorch-style uniform(-1/sqrt(fan_in), +1/sqrt(fan_in)) init, deterministic.
    fan_in = C_IN * KSZ
    bound = 1.0 / (fan_in ** 0.5)
    weight = jax.random.uniform(k_w, (C_OUT, C_IN, KSZ), jnp.float32, -bound, bound)
    bias = jax.random.uniform(k_b, (C_OUT,), jnp.float32, -bound, bound)

    out = conv1d_padding_valid(x, weight, bias)
    out = jax.block_until_ready(out)

    # Reference: plain JAX NCL conv with 'VALID' padding.
    ref = jax.lax.conv_general_dilated(
        x, weight, window_strides=(1,), padding="VALID",
        dimension_numbers=("NCH", "OIH", "NCH"),
    ) + bias.reshape(1, C_OUT, 1)

    assert out.shape == (N, C_OUT, L - KSZ + 1)
    assert jnp.allclose(out, ref, atol=1e-5, rtol=1e-5)
    print("KERNEL_OK")
</pallas_src>

<mosaic_0001>
module attributes {stable_mosaic.version = 11 : i64} {
  func.func @conv1d_valid_kernel(%arg0: memref<8x1280xf32, #tpu.memory_space<vmem>>, %arg1: memref<3x3x8xf32, #tpu.memory_space<vmem>>, %arg2: memref<3x1280xf32, #tpu.memory_space<vmem>>) attributes {dimension_semantics = [], scalar_prefetch = 0 : i64, scratch_operands = 0 : i64, tpu.core_type = #tpu.core_type<tc>} {
    %c0 = arith.constant 0 : index
    %c0_0 = arith.constant 0 : index
    %0 = vector.load %arg0[%c0, %c0_0] : memref<8x1280xf32, #tpu.memory_space<vmem>>, vector<8x1280xf32>
    %c0_1 = arith.constant 0 : index
    %c0_2 = arith.constant 0 : index
    %c0_3 = arith.constant 0 : index
    %1 = vector.load %arg1[%c0_1, %c0_2, %c0_3] : memref<3x3x8xf32, #tpu.memory_space<vmem>>, vector<1x3x8xf32>
    %2 = vector.shape_cast %1 : vector<1x3x8xf32> to vector<3x8xf32>
    %cst = arith.constant dense<0.000000e+00> : vector<3x1280xf32>
    %3 = tpu.matmul %2, %0, %cst {dimension_numbers = #tpu.dot_dimension_numbers<[1], [0], [0], [1], [0, 0, 1, 1], [], []>} : vector<3x8xf32>, vector<8x1280xf32>, vector<3x1280xf32> -> vector<3x1280xf32>
    %c1279_i32 = arith.constant 1279 : i32
    %4 = tpu.dynamic_rotate %0 by %c1279_i32 dim 1 : vector<8x1280xf32>, i32 -> vector<8x1280xf32>
    %c1 = arith.constant 1 : index
    %c0_4 = arith.constant 0 : index
    %c0_5 = arith.constant 0 : index
    %5 = vector.load %arg1[%c1, %c0_4, %c0_5] : memref<3x3x8xf32, #tpu.memory_space<vmem>>, vector<1x3x8xf32>
    %6 = vector.shape_cast %5 : vector<1x3x8xf32> to vector<3x8xf32>
    %cst_6 = arith.constant dense<0.000000e+00> : vector<3x1280xf32>
    %7 = tpu.matmul %6, %4, %cst_6 {dimension_numbers = #tpu.dot_dimension_numbers<[1], [0], [0], [1], [0, 0, 1, 1], [], []>} : vector<3x8xf32>, vector<8x1280xf32>, vector<3x1280xf32> -> vector<3x1280xf32>
    %8 = arith.addf %3, %7 : vector<3x1280xf32>
    %c1278_i32 = arith.constant 1278 : i32
    %9 = tpu.dynamic_rotate %0 by %c1278_i32 dim 1 : vector<8x1280xf32>, i32 -> vector<8x1280xf32>
    %c2 = arith.constant 2 : index
    %c0_7 = arith.constant 0 : index
    %c0_8 = arith.constant 0 : index
    %10 = vector.load %arg1[%c2, %c0_7, %c0_8] : memref<3x3x8xf32, #tpu.memory_space<vmem>>, vector<1x3x8xf32>
    %11 = vector.shape_cast %10 : vector<1x3x8xf32> to vector<3x8xf32>
    %cst_9 = arith.constant dense<0.000000e+00> : vector<3x1280xf32>
    %12 = tpu.matmul %11, %9, %cst_9 {dimension_numbers = #tpu.dot_dimension_numbers<[1], [0], [0], [1], [0, 0, 1, 1], [], []>} : vector<3x8xf32>, vector<8x1280xf32>, vector<3x1280xf32> -> vector<3x1280xf32>
    %13 = arith.addf %8, %12 : vector<3x1280xf32>
    %c0_10 = arith.constant 0 : index
    %c0_11 = arith.constant 0 : index
    %14 = vector.load %arg2[%c0_10, %c0_11] : memref<3x1280xf32, #tpu.memory_space<vmem>>, vector<3x1280xf32>
    tpu.vector_store %arg2[%c0_10, %c0_11], %13 {strides = array<i32>} : memref<3x1280xf32, #tpu.memory_space<vmem>>, vector<3x1280xf32>,
    return
  }
}

</mosaic_0001>

<llo_original>
// kernel: conv1d_padding_valid.1
$region0: #{conv1d_padding_valid.1}
  #allocation0 [shape = 'u32[]', space=smem, size = 0x4, offset = 0x4, fixed_abs, tag = 'smem constant byte address 0x4 - core index']
  #allocation1 [shape = 'u32[72,128]{1,0:T(1,128)}', space=vmem, size = 0x9000, scoped, tag = 'internal scratch']
  %s0 = inlined_call_operand.vmem [shape: f32[8,1280], index: 0, kind: input, shape index: {}]
  %s1 = inlined_call_operand.vmem [shape: f32[3,3,8], index: 1, kind: input, shape index: {}]
  %s2 = inlined_call_operand.vmem [shape: f32[3,1280], index: 2, kind: output, shape index: {}]
  %s3 = sld [smem:[#allocation0]]
  $region18: #{conv1d_padding_valid.1} parent=0
    _
  %s5 = ssub.s32 1, %s3
  %s6 = scalar_select 0, %s5, %s3
  // Predicated region
  $region2: #{conv1d_padding_valid.1} parent=0 // pred_check
    _
  $region3: #{conv1d_padding_valid.1} parent=0 // pred_check_branch
    %8 = sbr.rel (0) target = $region5
  $region4: #{conv1d_padding_valid.1} parent=0 // pred_region
    _
  $region5: #{conv1d_padding_valid.1} parent=0 // pred_fallthru
    _
  // Predicated region
  $region6: #{conv1d_padding_valid.1} parent=0 // pred_check
    _
  $region7: #{conv1d_padding_valid.1} parent=0 // pred_check_branch
    %10 = sbr.rel (0) target = $region9
  $region8: #{conv1d_padding_valid.1} parent=0 // pred_region
    _
  $region9: #{conv1d_padding_valid.1} parent=0 // pred_fallthru
    _
  %v11 = vld [vmem:[%s0] sm:$0xff]
  %v12 = vld [vmem:[%s0 + $0x8] sm:$0xff]
  %v13 = vld [vmem:[%s0 + $0x10] sm:$0xff]
  %v14 = vld [vmem:[%s0 + $0x18] sm:$0xff]
  %v15 = vld [vmem:[%s0 + $0x20] sm:$0xff]
  %v16 = vld [vmem:[%s0 + $0x28] sm:$0xff]
  %v17 = vld [vmem:[%s0 + $0x30] sm:$0xff]
  %v18 = vld [vmem:[%s0 + $0x38] sm:$0xff]
  %v19 = vld [vmem:[%s0 + $0x40] sm:$0xff]
  %v20 = vld [vmem:[%s0 + $0x48] sm:$0xff]
  %v21 = vld [vmem:[%s1] sm:$0x7]
  %22 = vrot.lane.b32.xlu0 %v11, 127
  %v23 = vpop.permute.xlu0 %22
  %24 = vrot.lane.b32.xlu0 %v12, 127
  %v25 = vpop.permute.xlu0 %24
  %26 = vrot.lane.b32.xlu0 %v13, 127
  %v27 = vpop.permute.xlu0 %26
  %28 = vrot.lane.b32.xlu0 %v14, 127
  %v29 = vpop.permute.xlu0 %28
  %30 = vrot.lane.b32.xlu0 %v15, 127
  %v31 = vpop.permute.xlu0 %30
  %32 = vrot.lane.b32.xlu0 %v16, 127
  %v33 = vpop.permute.xlu0 %32
  %34 = vrot.lane.b32.xlu0 %v17, 127
  %v35 = vpop.permute.xlu0 %34
  %36 = vrot.lane.b32.xlu0 %v18, 127
  %v37 = vpop.permute.xlu0 %36
  %38 = vrot.lane.b32.xlu0 %v19, 127
  %v39 = vpop.permute.xlu0 %38
  %40 = vrot.lane.b32.xlu0 %v20, 127
  %v41 = vpop.permute.xlu0 %40
  %v42 = vlaneseq
  %v43 = vand.u32 %v42, 127
  %vm44 = vcmp.lt.s32.totalorder %v43, 127
  %v45 = vsel %vm44, %v39, %v41
  %v46 = vsel %vm44, %v37, %v39
  %v47 = vsel %vm44, %v35, %v37
  %v48 = vsel %vm44, %v33, %v35
  %v49 = vsel %vm44, %v31, %v33
  %v50 = vsel %vm44, %v29, %v31
  %v51 = vsel %vm44, %v27, %v29
  %v52 = vsel %vm44, %v25, %v27
  %v53 = vsel %vm44, %v23, %v25
  %v54 = vsel %vm44, %v41, %v23
  %s55 = scalar_lea.vmem %s1, 4
  %v56 = vld [vmem:[%s55] sm:$0x7]
  %vm57 = vcmask 64512
  %v59 = vsel %vm57, %v56, 0
  %61 = vmatpush.msra.mxu0 0.0
  %62 = vmatpush.msra.mxu0 0.0
  %63 = vmatpush.msra.mxu0 0.0
  %64 = vmatpush.msra.mxu0 0.0
  %65 = vmatpush.msra.mxu0 0.0
  %66 = vmatpush.msra.mxu0 0.0
  %67 = vmatpush.msra.mxu0 0.0
  %68 = vmatpush.msra.mxu0 0.0
  %69 = vmatpush.msra.mxu0 0.0
  %70 = vmatpush.msra.mxu0 0.0
  %71 = vmatpush.msra.mxu0 0.0
  %72 = vmatpush.msra.mxu0 0.0
  %73 = vmatpush.msra.mxu0 0.0
  %74 = vmatpush.msra.mxu0 0.0
  %75 = vmatpush.msra.mxu0 0.0
  %76 = vmatpush.msra.mxu0 %v53
  %77 = vmatmul.f32.gmra.mxu0 %v59
  %v78 = vpop.f32.mrf.mxu0
  %v79 = vadd.f32 0.0, %v78
  %80 = vdwg.mxu0
  %81 = vmatpush.msra.mxu0 0.0
  %82 = vmatpush.msra.mxu0 0.0
  %83 = vmatpush.msra.mxu0 0.0
  %84 = vmatpush.msra.mxu0 0.0
  %85 = vmatpush.msra.mxu0 0.0
  %86 = vmatpush.msra.mxu0 0.0
  %87 = vmatpush.msra.mxu0 0.0
  %88 = vmatpush.msra.mxu0 0.0
  %89 = vmatpush.msra.mxu0 0.0
  %90 = vmatpush.msra.mxu0 0.0
  %91 = vmatpush.msra.mxu0 0.0
  %92 = vmatpush.msra.mxu0 0.0
  %93 = vmatpush.msra.mxu0 0.0
  %94 = vmatpush.msra.mxu0 0.0
  %95 = vmatpush.msra.mxu0 0.0
  %96 = vmatpush.msra.mxu0 %v52
  %97 = vmatmul.f32.gmra.mxu0 %v59
  %v98 = vpop.f32.mrf.mxu0
  %v99 = vadd.f32 0.0, %v98
  %100 = vdwg.mxu0
  %101 = vmatpush.msra.mxu0 0.0
  %102 = vmatpush.msra.mxu0 0.0
  %103 = vmatpush.msra.mxu0 0.0
  %104 = vmatpush.msra.mxu0 0.0
  %105 = vmatpush.msra.mxu0 0.0
  %106 = vmatpush.msra.mxu0 0.0
  %107 = vmatpush.msra.mxu0 0.0
  %108 = vmatpush.msra.mxu0 0.0
  %109 = vmatpush.msra.mxu0 0.0
  %110 = vmatpush.msra.mxu0 0.0
  %111 = vmatpush.msra.mxu0 0.0
  %112 = vmatpush.msra.mxu0 0.0
  %113 = vmatpush.msra.mxu0 0.0
  %114 = vmatpush.msra.mxu0 0.0
  %115 = vmatpush.msra.mxu0 0.0
  %116 = vmatpush.msra.mxu0 %v51
  %117 = vmatmul.f32.gmra.mxu0 %v59
  %v118 = vpop.f32.mrf.mxu0
  %v119 = vadd.f32 0.0, %v118
  %120 = vdwg.mxu0
  %121 = vmatpush.msra.mxu0 0.0
  %122 = vmatpush.msra.mxu0 0.0
  %123 = vmatpush.msra.mxu0 0.0
  %124 = vmatpush.msra.mxu0 0.0
  %125 = vmatpush.msra.mxu0 0.0
  %126 = vmatpush.msra.mxu0 0.0
  %127 = vmatpush.msra.mxu0 0.0
  %128 = vmatpush.msra.mxu0 0.0
  %129 = vmatpush.msra.mxu0 0.0
  %130 = vmatpush.msra.mxu0 0.0
  %131 = vmatpush.msra.mxu0 0.0
  %132 = vmatpush.msra.mxu0 0.0
  %133 = vmatpush.msra.mxu0 0.0
  %134 = vmatpush.msra.mxu0 0.0
  %135 = vmatpush.msra.mxu0 0.0
  %136 = vmatpush.msra.mxu0 %v50
  %137 = vmatmul.f32.gmra.mxu0 %v59
  %v138 = vpop.f32.mrf.mxu0
  %v139 = vadd.f32 0.0, %v138
  %140 = vdwg.mxu0
  %141 = vmatpush.msra.mxu0 0.0
  %142 = vmatpush.msra.mxu0 0.0
  %143 = vmatpush.msra.mxu0 0.0
  %144 = vmatpush.msra.mxu0 0.0
  %145 = vmatpush.msra.mxu0 0.0
  %146 = vmatpush.msra.mxu0 0.0
  %147 = vmatpush.msra.mxu0 0.0
  %148 = vmatpush.msra.mxu0 0.0
  %149 = vmatpush.msra.mxu0 0.0
  %150 = vmatpush.msra.mxu0 0.0
  %151 = vmatpush.msra.mxu0 0.0
  %152 = vmatpush.msra.mxu0 0.0
  %153 = vmatpush.msra.mxu0 0.0
  %154 = vmatpush.msra.mxu0 0.0
  %155 = vmatpush.msra.mxu0 0.0
  %156 = vmatpush.msra.mxu0 %v49
  %157 = vmatmul.f32.gmra.mxu0 %v59
  %v158 = vpop.f32.mrf.mxu0
  %v159 = vadd.f32 0.0, %v158
  %160 = vdwg.mxu0
  %161 = vmatpush.msra.mxu0 0.0
  %162 = vmatpush.msra.mxu0 0.0
  %163 = vmatpush.msra.mxu0 0.0
  %164 = vmatpush.msra.mxu0 0.0
  %165 = vmatpush.msra.mxu0 0.0
  %166 = vmatpush.msra.mxu0 0.0
  %167 = vmatpush.msra.mxu0 0.0
  %168 = vmatpush.msra.mxu0 0.0
  %169 = vmatpush.msra.mxu0 0.0
  %170 = vmatpush.msra.mxu0 0.0
  %171 = vmatpush.msra.mxu0 0.0
  %172 = vmatpush.msra.mxu0 0.0
  %173 = vmatpush.msra.mxu0 0.0
  %174 = vmatpush.msra.mxu0 0.0
  %175 = vmatpush.msra.mxu0 0.0
  %176 = vmatpush.msra.mxu0 %v48
  %177 = vmatmul.f32.gmra.mxu0 %v59
  %v178 = vpop.f32.mrf.mxu0
  %v179 = vadd.f32 0.0, %v178
  %180 = vdwg.mxu0
  %181 = vmatpush.msra.mxu0 0.0
  %182 = vmatpush.msra.mxu0 0.0
  %183 = vmatpush.msra.mxu0 0.0
  %184 = vmatpush.msra.mxu0 0.0
  %185 = vmatpush.msra.mxu0 0.0
  %186 = vmatpush.msra.mxu0 0.0
  %187 = vmatpush.msra.mxu0 0.0
  %188 = vmatpush.msra.mxu0 0.0
  %189 = vmatpush.msra.mxu0 0.0
  %190 = vmatpush.msra.mxu0 0.0
  %191 = vmatpush.msra.mxu0 0.0
  %192 = vmatpush.msra.mxu0 0.0
  %193 = vmatpush.msra.mxu0 0.0
  %194 = vmatpush.msra.mxu0 0.0
  %195 = vmatpush.msra.mxu0 0.0
  %196 = vmatpush.msra.mxu0 %v47
  %197 = vmatmul.f32.gmra.mxu0 %v59
  %v198 = vpop.f32.mrf.mxu0
  %v199 = vadd.f32 0.0, %v198
  %200 = vdwg.mxu0
  %201 = vmatpush.msra.mxu0 0.0
  %202 = vmatpush.msra.mxu0 0.0
  %203 = vmatpush.msra.mxu0 0.0
  %204 = vmatpush.msra.mxu0 0.0
  %205 = vmatpush.msra.mxu0 0.0
  %206 = vmatpush.msra.mxu0 0.0
  %207 = vmatpush.msra.mxu0 0.0
  %208 = vmatpush.msra.mxu0 0.0
  %209 = vmatpush.msra.mxu0 0.0
  %210 = vmatpush.msra.mxu0 0.0
  %211 = vmatpush.msra.mxu0 0.0
  %212 = vmatpush.msra.mxu0 0.0
  %213 = vmatpush.msra.mxu0 0.0
  %214 = vmatpush.msra.mxu0 0.0
  %215 = vmatpush.msra.mxu0 0.0
  %216 = vmatpush.msra.mxu0 %v46
  %217 = vmatmul.f32.gmra.mxu0 %v59
  %v218 = vpop.f32.mrf.mxu0
  %v219 = vadd.f32 0.0, %v218
  %220 = vdwg.mxu0
  %221 = vmatpush.msra.mxu0 0.0
  %222 = vmatpush.msra.mxu0 0.0
  %223 = vmatpush.msra.mxu0 0.0
  %224 = vmatpush.msra.mxu0 0.0
  %225 = vmatpush.msra.mxu0 0.0
  %226 = vmatpush.msra.mxu0 0.0
  %227 = vmatpush.msra.mxu0 0.0
  %228 = vmatpush.msra.mxu0 0.0
  %229 = vmatpush.msra.mxu0 0.0
  %230 = vmatpush.msra.mxu0 0.0
  %231 = vmatpush.msra.mxu0 0.0
  %232 = vmatpush.msra.mxu0 0.0
  %233 = vmatpush.msra.mxu0 0.0
  %234 = vmatpush.msra.mxu0 0.0
  %235 = vmatpush.msra.mxu0 0.0
  %236 = vmatpush.msra.mxu0 %v45
  %237 = vmatmul.f32.gmra.mxu0 %v59
  %v238 = vpop.f32.mrf.mxu0
  %v239 = vadd.f32 0.0, %v238
  %240 = vdwg.mxu0
  %241 = vmatpush.msra.mxu0 0.0
  %242 = vmatpush.msra.mxu0 0.0
  %243 = vmatpush.msra.mxu0 0.0
  %244 = vmatpush.msra.mxu0 0.0
  %245 = vmatpush.msra.mxu0 0.0
  %246 = vmatpush.msra.mxu0 0.0
  %247 = vmatpush.msra.mxu0 0.0
  %248 = vmatpush.msra.mxu0 0.0
  %249 = vmatpush.msra.mxu0 0.0
  %250 = vmatpush.msra.mxu0 0.0
  %251 = vmatpush.msra.mxu0 0.0
  %252 = vmatpush.msra.mxu0 0.0
  %253 = vmatpush.msra.mxu0 0.0
  %254 = vmatpush.msra.mxu0 0.0
  %255 = vmatpush.msra.mxu0 0.0
  %256 = vmatpush.msra.mxu0 %v54
  %257 = vmatmul.f32.gmra.mxu0 %v59
  %v258 = vpop.f32.mrf.mxu0
  %v259 = vadd.f32 0.0, %v258
  %260 = vdwg.mxu0
  %v262 = vsel %vm57, %v21, 0
  %264 = vmatpush.msra.mxu0 0.0
  %265 = vmatpush.msra.mxu0 0.0
  %266 = vmatpush.msra.mxu0 0.0
  %267 = vmatpush.msra.mxu0 0.0
  %268 = vmatpush.msra.mxu0 0.0
  %269 = vmatpush.msra.mxu0 0.0
  %270 = vmatpush.msra.mxu0 0.0
  %271 = vmatpush.msra.mxu0 0.0
  %272 = vmatpush.msra.mxu0 0.0
  %273 = vmatpush.msra.mxu0 0.0
  %274 = vmatpush.msra.mxu0 0.0
  %275 = vmatpush.msra.mxu0 0.0
  %276 = vmatpush.msra.mxu0 0.0
  %277 = vmatpush.msra.mxu0 0.0
  %278 = vmatpush.msra.mxu0 0.0
  %279 = vmatpush.msra.mxu0 %v11
  %280 = vmatmul.f32.gmra.mxu0 %v262
  %v281 = vpop.f32.mrf.mxu0
  %v282 = vadd.f32 %v79, %v281
  %283 = vdwg.mxu0
  %284 = vmatpush.msra.mxu0 0.0
  %285 = vmatpush.msra.mxu0 0.0
  %286 = vmatpush.msra.mxu0 0.0
  %287 = vmatpush.msra.mxu0 0.0
  %288 = vmatpush.msra.mxu0 0.0
  %289 = vmatpush.msra.mxu0 0.0
  %290 = vmatpush.msra.mxu0 0.0
  %291 = vmatpush.msra.mxu0 0.0
  %292 = vmatpush.msra.mxu0 0.0
  %293 = vmatpush.msra.mxu0 0.0
  %294 = vmatpush.msra.mxu0 0.0
  %295 = vmatpush.msra.mxu0 0.0
  %296 = vmatpush.msra.mxu0 0.0
  %297 = vmatpush.msra.mxu0 0.0
  %298 = vmatpush.msra.mxu0 0.0
  %299 = vmatpush.msra.mxu0 %v12
  %300 = vmatmul.f32.gmra.mxu0 %v262
  %v301 = vpop.f32.mrf.mxu0
  %v302 = vadd.f32 %v99, %v301
  %303 = vdwg.mxu0
  %304 = vmatpush.msra.mxu0 0.0
  %305 = vmatpush.msra.mxu0 0.0
  %306 = vmatpush.msra.mxu0 0.0
  %307 = vmatpush.msra.mxu0 0.0
  %308 = vmatpush.msra.mxu0 0.0
  %309 = vmatpush.msra.mxu0 0.0
  %310 = vmatpush.msra.mxu0 0.0
  %311 = vmatpush.msra.mxu0 0.0
  %312 = vmatpush.msra.mxu0 0.0
  %313 = vmatpush.msra.mxu0 0.0
  %314 = vmatpush.msra.mxu0 0.0
  %315 = vmatpush.msra.mxu0 0.0
  %316 = vmatpush.msra.mxu0 0.0
  %317 = vmatpush.msra.mxu0 0.0
  %318 = vmatpush.msra.mxu0 0.0
  %319 = vmatpush.msra.mxu0 %v13
  %320 = vmatmul.f32.gmra.mxu0 %v262
  %v321 = vpop.f32.mrf.mxu0
  %v322 = vadd.f32 %v119, %v321
  %323 = vdwg.mxu0
  %324 = vmatpush.msra.mxu0 0.0
  %325 = vmatpush.msra.mxu0 0.0
  %326 = vmatpush.msra.mxu0 0.0
  %327 = vmatpush.msra.mxu0 0.0
  %328 = vmatpush.msra.mxu0 0.0
  %329 = vmatpush.msra.mxu0 0.0
  %330 = vmatpush.msra.mxu0 0.0
  %331 = vmatpush.msra.mxu0 0.0
  %332 = vmatpush.msra.mxu0 0.0
  %333 = vmatpush.msra.mxu0 0.0
  %334 = vmatpush.msra.mxu0 0.0
  %335 = vmatpush.msra.mxu0 0.0
  %336 = vmatpush.msra.mxu0 0.0
  %337 = vmatpush.msra.mxu0 0.0
  %338 = vmatpush.msra.mxu0 0.0
  %339 = vmatpush.msra.mxu0 %v14
  %340 = vmatmul.f32.gmra.mxu0 %v262
  %v341 = vpop.f32.mrf.mxu0
  %v342 = vadd.f32 %v139, %v341
  %343 = vdwg.mxu0
  %344 = vmatpush.msra.mxu0 0.0
  %345 = vmatpush.msra.mxu0 0.0
  %346 = vmatpush.msra.mxu0 0.0
  %347 = vmatpush.msra.mxu0 0.0
  %348 = vmatpush.msra.mxu0 0.0
  %349 = vmatpush.msra.mxu0 0.0
  %350 = vmatpush.msra.mxu0 0.0
  %351 = vmatpush.msra.mxu0 0.0
  %352 = vmatpush.msra.mxu0 0.0
  %353 = vmatpush.msra.mxu0 0.0
  %354 = vmatpush.msra.mxu0 0.0
  %355 = vmatpush.msra.mxu0 0.0
  %356 = vmatpush.msra.mxu0 0.0
  %357 = vmatpush.msra.mxu0 0.0
  %358 = vmatpush.msra.mxu0 0.0
  %359 = vmatpush.msra.mxu0 %v15
  %360 = vmatmul.f32.gmra.mxu0 %v262
  %v361 = vpop.f32.mrf.mxu0
  %v362 = vadd.f32 %v159, %v361
  %363 = vdwg.mxu0
  %364 = vmatpush.msra.mxu0 0.0
  %365 = vmatpush.msra.mxu0 0.0
  %366 = vmatpush.msra.mxu0 0.0
  %367 = vmatpush.msra.mxu0 0.0
  %368 = vmatpush.msra.mxu0 0.0
  %369 = vmatpush.msra.mxu0 0.0
  %370 = vmatpush.msra.mxu0 0.0
  %371 = vmatpush.msra.mxu0 0.0
  %372 = vmatpush.msra.mxu0 0.0
  %373 = vmatpush.msra.mxu0 0.0
  %374 = vmatpush.msra.mxu0 0.0
  %375 = vmatpush.msra.mxu0 0.0
  %376 = vmatpush.msra.mxu0 0.0
  %377 = vmatpush.msra.mxu0 0.0
  %378 = vmatpush.msra.mxu0 0.0
  %379 = vmatpush.msra.mxu0 %v16
  %380 = vmatmul.f32.gmra.mxu0 %v262
  %v381 = vpop.f32.mrf.mxu0
  %v382 = vadd.f32 %v179, %v381
  %383 = vdwg.mxu0
  %384 = vmatpush.msra.mxu0 0.0
  %385 = vmatpush.msra.mxu0 0.0
  %386 = vmatpush.msra.mxu0 0.0
  %387 = vmatpush.msra.mxu0 0.0
  %388 = vmatpush.msra.mxu0 0.0
  %389 = vmatpush.msra.mxu0 0.0
  %390 = vmatpush.msra.mxu0 0.0
  %391 = vmatpush.msra.mxu0 0.0
  %392 = vmatpush.msra.mxu0 0.0
  %393 = vmatpush.msra.mxu0 0.0
  %394 = vmatpush.msra.mxu0 0.0
  %395 = vmatpush.msra.mxu0 0.0
  %396 = vmatpush.msra.mxu0 0.0
  %397 = vmatpush.msra.mxu0 0.0
  %398 = vmatpush.msra.mxu0 0.0
  %399 = vmatpush.msra.mxu0 %v17
  %400 = vmatmul.f32.gmra.mxu0 %v262
  %v401 = vpop.f32.mrf.mxu0
  %v402 = vadd.f32 %v199, %v401
  %403 = vdwg.mxu0
  %404 = vmatpush.msra.mxu0 0.0
  %405 = vmatpush.msra.mxu0 0.0
  %406 = vmatpush.msra.mxu0 0.0
  %407 = vmatpush.msra.mxu0 0.0
  %408 = vmatpush.msra.mxu0 0.0
  %409 = vmatpush.msra.mxu0 0.0
  %410 = vmatpush.msra.mxu0 0.0
  %411 = vmatpush.msra.mxu0 0.0
  %412 = vmatpush.msra.mxu0 0.0
  %413 = vmatpush.msra.mxu0 0.0
  %414 = vmatpush.msra.mxu0 0.0
  %415 = vmatpush.msra.mxu0 0.0
  %416 = vmatpush.msra.mxu0 0.0
  %417 = vmatpush.msra.mxu0 0.0
  %418 = vmatpush.msra.mxu0 0.0
  %419 = vmatpush.msra.mxu0 %v18
  %420 = vmatmul.f32.gmra.mxu0 %v262
  %v421 = vpop.f32.mrf.mxu0
  %v422 = vadd.f32 %v219, %v421
  %423 = vdwg.mxu0
  %424 = vmatpush.msra.mxu0 0.0
  %425 = vmatpush.msra.mxu0 0.0
  %426 = vmatpush.msra.mxu0 0.0
  %427 = vmatpush.msra.mxu0 0.0
  %428 = vmatpush.msra.mxu0 0.0
  %429 = vmatpush.msra.mxu0 0.0
  %430 = vmatpush.msra.mxu0 0.0
  %431 = vmatpush.msra.mxu0 0.0
  %432 = vmatpush.msra.mxu0 0.0
  %433 = vmatpush.msra.mxu0 0.0
  %434 = vmatpush.msra.mxu0 0.0
  %435 = vmatpush.msra.mxu0 0.0
  %436 = vmatpush.msra.mxu0 0.0
  %437 = vmatpush.msra.mxu0 0.0
  %438 = vmatpush.msra.mxu0 0.0
  %439 = vmatpush.msra.mxu0 %v19
  %440 = vmatmul.f32.gmra.mxu0 %v262
  %v441 = vpop.f32.mrf.mxu0
  %v442 = vadd.f32 %v239, %v441
  %443 = vdwg.mxu0
  %444 = vmatpush.msra.mxu0 0.0
  %445 = vmatpush.msra.mxu0 0.0
  %446 = vmatpush.msra.mxu0 0.0
  %447 = vmatpush.msra.mxu0 0.0
  %448 = vmatpush.msra.mxu0 0.0
  %449 = vmatpush.msra.mxu0 0.0
  %450 = vmatpush.msra.mxu0 0.0
  %451 = vmatpush.msra.mxu0 0.0
  %452 = vmatpush.msra.mxu0 0.0
  %453 = vmatpush.msra.mxu0 0.0
  %454 = vmatpush.msra.mxu0 0.0
  %455 = vmatpush.msra.mxu0 0.0
  %456 = vmatpush.msra.mxu0 0.0
  %457 = vmatpush.msra.mxu0 0.0
  %458 = vmatpush.msra.mxu0 0.0
  %459 = vmatpush.msra.mxu0 %v20
  %460 = vmatmul.f32.gmra.mxu0 %v262
  %v461 = vpop.f32.mrf.mxu0
  %v462 = vadd.f32 %v259, %v461
  %463 = vdwg.mxu0
  %464 = vrot.lane.b32.xlu0 %v11, 126
  %v465 = vpop.permute.xlu0 %464
  %466 = vrot.lane.b32.xlu0 %v12, 126
  %v467 = vpop.permute.xlu0 %466
  %468 = vrot.lane.b32.xlu0 %v13, 126
  %v469 = vpop.permute.xlu0 %468
  %470 = vrot.lane.b32.xlu0 %v14, 126
  %v471 = vpop.permute.xlu0 %470
  %472 = vrot.lane.b32.xlu0 %v15, 126
  %v473 = vpop.permute.xlu0 %472
  %474 = vrot.lane.b32.xlu0 %v16, 126
  %v475 = vpop.permute.xlu0 %474
  %476 = vrot.lane.b32.xlu0 %v17, 126
  %v477 = vpop.permute.xlu0 %476
  %478 = vrot.lane.b32.xlu0 %v18, 126
  %v479 = vpop.permute.xlu0 %478
  %480 = vrot.lane.b32.xlu0 %v19, 126
  %v481 = vpop.permute.xlu0 %480
  %482 = vrot.lane.b32.xlu0 %v20, 126
  %v483 = vpop.permute.xlu0 %482
  %vm484 = vcmp.lt.s32.totalorder %v43, 126
  %v485 = vsel %vm484, %v481, %v483
  %v486 = vsel %vm484, %v479, %v481
  %v487 = vsel %vm484, %v477, %v479
  %v488 = vsel %vm484, %v475, %v477
  %v489 = vsel %vm484, %v473, %v475
  %v490 = vsel %vm484, %v471, %v473
  %v491 = vsel %vm484, %v469, %v471
  %v492 = vsel %vm484, %v467, %v469
  %v493 = vsel %vm484, %v465, %v467
  %v494 = vsel %vm484, %v483, %v465
  %s495 = scalar_lea.vmem %s1, 8
  %v496 = vld [vmem:[%s495] sm:$0x7]
  %v498 = vsel %vm57, %v496, 0
  %500 = vmatpush.msra.mxu0 0.0
  %501 = vmatpush.msra.mxu0 0.0
  %502 = vmatpush.msra.mxu0 0.0
  %503 = vmatpush.msra.mxu0 0.0
  %504 = vmatpush.msra.mxu0 0.0
  %505 = vmatpush.msra.mxu0 0.0
  %506 = vmatpush.msra.mxu0 0.0
  %507 = vmatpush.msra.mxu0 0.0
  %508 = vmatpush.msra.mxu0 0.0
  %509 = vmatpush.msra.mxu0 0.0
  %510 = vmatpush.msra.mxu0 0.0
  %511 = vmatpush.msra.mxu0 0.0
  %512 = vmatpush.msra.mxu0 0.0
  %513 = vmatpush.msra.mxu0 0.0
  %514 = vmatpush.msra.mxu0 0.0
  %515 = vmatpush.msra.mxu0 %v493
  %516 = vmatmul.f32.gmra.mxu0 %v498
  %v517 = vpop.f32.mrf.mxu0
  %v518 = vadd.f32 0.0, %v517
  %519 = vdwg.mxu0
  %520 = vmatpush.msra.mxu0 0.0
  %521 = vmatpush.msra.mxu0 0.0
  %522 = vmatpush.msra.mxu0 0.0
  %523 = vmatpush.msra.mxu0 0.0
  %524 = vmatpush.msra.mxu0 0.0
  %525 = vmatpush.msra.mxu0 0.0
  %526 = vmatpush.msra.mxu0 0.0
  %527 = vmatpush.msra.mxu0 0.0
  %528 = vmatpush.msra.mxu0 0.0
  %529 = vmatpush.msra.mxu0 0.0
  %530 = vmatpush.msra.mxu0 0.0
  %531 = vmatpush.msra.mxu0 0.0
  %532 = vmatpush.msra.mxu0 0.0
  %533 = vmatpush.msra.mxu0 0.0
  %534 = vmatpush.msra.mxu0 0.0
  %535 = vmatpush.msra.mxu0 %v492
  %536 = vmatmul.f32.gmra.mxu0 %v498
  %v537 = vpop.f32.mrf.mxu0
  %v538 = vadd.f32 0.0, %v537
  %539 = vdwg.mxu0
  %540 = vmatpush.msra.mxu0 0.0
  %541 = vmatpush.msra.mxu0 0.0
  %542 = vmatpush.msra.mxu0 0.0
  %543 = vmatpush.msra.mxu0 0.0
  %544 = vmatpush.msra.mxu0 0.0
  %545 = vmatpush.msra.mxu0 0.0
  %546 = vmatpush.msra.mxu0 0.0
  %547 = vmatpush.msra.mxu0 0.0
  %548 = vmatpush.msra.mxu0 0.0
  %549 = vmatpush.msra.mxu0 0.0
  %550 = vmatpush.msra.mxu0 0.0
  %551 = vmatpush.msra.mxu0 0.0
  %552 = vmatpush.msra.mxu0 0.0
  %553 = vmatpush.msra.mxu0 0.0
  %554 = vmatpush.msra.mxu0 0.0
  %555 = vmatpush.msra.mxu0 %v491
  %556 = vmatmul.f32.gmra.mxu0 %v498
  %v557 = vpop.f32.mrf.mxu0
  %v558 = vadd.f32 0.0, %v557
  %559 = vdwg.mxu0
  %560 = vmatpush.msra.mxu0 0.0
  %561 = vmatpush.msra.mxu0 0.0
  %562 = vmatpush.msra.mxu0 0.0
  %563 = vmatpush.msra.mxu0 0.0
  %564 = vmatpush.msra.mxu0 0.0
  %565 = vmatpush.msra.mxu0 0.0
  %566 = vmatpush.msra.mxu0 0.0
  %567 = vmatpush.msra.mxu0 0.0
  %568 = vmatpush.msra.mxu0 0.0
  %569 = vmatpush.msra.mxu0 0.0
  %570 = vmatpush.msra.mxu0 0.0
  %571 = vmatpush.msra.mxu0 0.0
  %572 = vmatpush.msra.mxu0 0.0
  %573 = vmatpush.msra.mxu0 0.0
  %574 = vmatpush.msra.mxu0 0.0
  %575 = vmatpush.msra.mxu0 %v490
  %576 = vmatmul.f32.gmra.mxu0 %v498
  %v577 = vpop.f32.mrf.mxu0
  %v578 = vadd.f32 0.0, %v577
  %579 = vdwg.mxu0
  %580 = vmatpush.msra.mxu0 0.0
  %581 = vmatpush.msra.mxu0 0.0
  %582 = vmatpush.msra.mxu0 0.0
  %583 = vmatpush.msra.mxu0 0.0
  %584 = vmatpush.msra.mxu0 0.0
  %585 = vmatpush.msra.mxu0 0.0
  %586 = vmatpush.msra.mxu0 0.0
  %587 = vmatpush.msra.mxu0 0.0
  %588 = vmatpush.msra.mxu0 0.0
  %589 = vmatpush.msra.mxu0 0.0
  %590 = vmatpush.msra.mxu0 0.0
  %591 = vmatpush.msra.mxu0 0.0
  %592 = vmatpush.msra.mxu0 0.0
  %593 = vmatpush.msra.mxu0 0.0
  %594 = vmatpush.msra.mxu0 0.0
  %595 = vmatpush.msra.mxu0 %v489
  %596 = vmatmul.f32.gmra.mxu0 %v498
  %v597 = vpop.f32.mrf.mxu0
  %v598 = vadd.f32 0.0, %v597
  %599 = vdwg.mxu0
  %600 = vmatpush.msra.mxu0 0.0
  %601 = vmatpush.msra.mxu0 0.0
  %602 = vmatpush.msra.mxu0 0.0
  %603 = vmatpush.msra.mxu0 0.0
  %604 = vmatpush.msra.mxu0 0.0
  %605 = vmatpush.msra.mxu0 0.0
  %606 = vmatpush.msra.mxu0 0.0
  %607 = vmatpush.msra.mxu0 0.0
  %608 = vmatpush.msra.mxu0 0.0
  %609 = vmatpush.msra.mxu0 0.0
  %610 = vmatpush.msra.mxu0 0.0
  %611 = vmatpush.msra.mxu0 0.0
  %612 = vmatpush.msra.mxu0 0.0
  %613 = vmatpush.msra.mxu0 0.0
  %614 = vmatpush.msra.mxu0 0.0
  %615 = vmatpush.msra.mxu0 %v488
  %616 = vmatmul.f32.gmra.mxu0 %v498
  %v617 = vpop.f32.mrf.mxu0
  %v618 = vadd.f32 0.0, %v617
  %619 = vdwg.mxu0
  %620 = vmatpush.msra.mxu0 0.0
  %621 = vmatpush.msra.mxu0 0.0
  %622 = vmatpush.msra.mxu0 0.0
  %623 = vmatpush.msra.mxu0 0.0
  %624 = vmatpush.msra.mxu0 0.0
  %625 = vmatpush.msra.mxu0 0.0
  %626 = vmatpush.msra.mxu0 0.0
  %627 = vmatpush.msra.mxu0 0.0
  %628 = vmatpush.msra.mxu0 0.0
  %629 = vmatpush.msra.mxu0 0.0
  %630 = vmatpush.msra.mxu0 0.0
  %631 = vmatpush.msra.mxu0 0.0
  %632 = vmatpush.msra.mxu0 0.0
  %633 = vmatpush.msra.mxu0 0.0
  %634 = vmatpush.msra.mxu0 0.0
  %635 = vmatpush.msra.mxu0 %v487
  %636 = vmatmul.f32.gmra.mxu0 %v498
  %v637 = vpop.f32.mrf.mxu0
  %v638 = vadd.f32 0.0, %v637
  %639 = vdwg.mxu0
  %640 = vmatpush.msra.mxu0 0.0
  %641 = vmatpush.msra.mxu0 0.0
  %642 = vmatpush.msra.mxu0 0.0
  %643 = vmatpush.msra.mxu0 0.0
  %644 = vmatpush.msra.mxu0 0.0
  %645 = vmatpush.msra.mxu0 0.0
  %646 = vmatpush.msra.mxu0 0.0
  %647 = vmatpush.msra.mxu0 0.0
  %648 = vmatpush.msra.mxu0 0.0
  %649 = vmatpush.msra.mxu0 0.0
  %650 = vmatpush.msra.mxu0 0.0
  %651 = vmatpush.msra.mxu0 0.0
  %652 = vmatpush.msra.mxu0 0.0
  %653 = vmatpush.msra.mxu0 0.0
  %654 = vmatpush.msra.mxu0 0.0
  %655 = vmatpush.msra.mxu0 %v486
  %656 = vmatmul.f32.gmra.mxu0 %v498
  %v657 = vpop.f32.mrf.mxu0
  %v658 = vadd.f32 0.0, %v657
  %659 = vdwg.mxu0
  %660 = vmatpush.msra.mxu0 0.0
  %661 = vmatpush.msra.mxu0 0.0
  %662 = vmatpush.msra.mxu0 0.0
  %663 = vmatpush.msra.mxu0 0.0
  %664 = vmatpush.msra.mxu0 0.0
  %665 = vmatpush.msra.mxu0 0.0
  %666 = vmatpush.msra.mxu0 0.0
  %667 = vmatpush.msra.mxu0 0.0
  %668 = vmatpush.msra.mxu0 0.0
  %669 = vmatpush.msra.mxu0 0.0
  %670 = vmatpush.msra.mxu0 0.0
  %671 = vmatpush.msra.mxu0 0.0
  %672 = vmatpush.msra.mxu0 0.0
  %673 = vmatpush.msra.mxu0 0.0
  %674 = vmatpush.msra.mxu0 0.0
  %675 = vmatpush.msra.mxu0 %v485
  %676 = vmatmul.f32.gmra.mxu0 %v498
  %v677 = vpop.f32.mrf.mxu0
  %v678 = vadd.f32 0.0, %v677
  %679 = vdwg.mxu0
  %680 = vmatpush.msra.mxu0 0.0
  %681 = vmatpush.msra.mxu0 0.0
  %682 = vmatpush.msra.mxu0 0.0
  %683 = vmatpush.msra.mxu0 0.0
  %684 = vmatpush.msra.mxu0 0.0
  %685 = vmatpush.msra.mxu0 0.0
  %686 = vmatpush.msra.mxu0 0.0
  %687 = vmatpush.msra.mxu0 0.0
  %688 = vmatpush.msra.mxu0 0.0
  %689 = vmatpush.msra.mxu0 0.0
  %690 = vmatpush.msra.mxu0 0.0
  %691 = vmatpush.msra.mxu0 0.0
  %692 = vmatpush.msra.mxu0 0.0
  %693 = vmatpush.msra.mxu0 0.0
  %694 = vmatpush.msra.mxu0 0.0
  %695 = vmatpush.msra.mxu0 %v494
  %696 = vmatmul.f32.gmra.mxu0 %v498
  %v697 = vpop.f32.mrf.mxu0
  %v698 = vadd.f32 0.0, %v697
  %699 = vdwg.mxu0
  %v700 = vadd.f32 %v282, %v518
  %v701 = vadd.f32 %v302, %v538
  %v702 = vadd.f32 %v322, %v558
  %v703 = vadd.f32 %v342, %v578
  %v704 = vadd.f32 %v362, %v598
  %v705 = vadd.f32 %v382, %v618
  %v706 = vadd.f32 %v402, %v638
  %v707 = vadd.f32 %v422, %v658
  %v708 = vadd.f32 %v442, %v678
  %v709 = vadd.f32 %v462, %v698
  %v720 = vrot.slane %v701, 4
  %v721 = vrot.slane %v703, 4
  %v722 = vrot.slane %v705, 4
  %v723 = vrot.slane %v707, 4
  %v724 = vrot.slane %v709, 4
  %vm725 = vcmask 1043456
  %v726 = vsel %vm725, %v700, %v720
  %v727 = vsel %vm725, %v702, %v721
  %v728 = vsel %vm725, %v704, %v722
  %v729 = vsel %vm725, %v706, %v723
  %v730 = vsel %vm725, %v708, %v724
  %736 = vst [vmem:[%s2] sm:$0x77] %v726
  %737 = vst [vmem:[%s2 + $0x8] sm:$0x77] %v727
  %738 = vst [vmem:[%s2 + $0x10] sm:$0x77] %v728
  %739 = vst [vmem:[%s2 + $0x18] sm:$0x77] %v729
  %740 = vst [vmem:[%s2 + $0x20] sm:$0x77] %v730
  // Predicated region
  $region10: #{conv1d_padding_valid.1} parent=0 // pred_check
    _
  $region11: #{conv1d_padding_valid.1} parent=0 // pred_check_branch
    %742 = sbr.rel (0) target = $region13
  $region12: #{conv1d_padding_valid.1} parent=0 // pred_region
    _
  $region13: #{conv1d_padding_valid.1} parent=0 // pred_fallthru
    _
  // Predicated region
  $region14: #{conv1d_padding_valid.1} parent=0 // pred_check
    _
  $region15: #{conv1d_padding_valid.1} parent=0 // pred_check_branch
    %744 = sbr.rel (0) target = $region17
  $region16: #{conv1d_padding_valid.1} parent=0 // pred_region
    _
  $region17: #{conv1d_padding_valid.1} parent=0 // pred_fallthru
    _

</llo_original>
